<compile_context>
chip_gen: v5e
topology: v5e:2x2
jax: 0.10.0
libtpu: 0.0.40
codegen_flags: <defaults>
</compile_context>

<pallas_src>
import functools

import jax
import jax.numpy as jnp
from jax.experimental import pallas as pl
from jax.experimental.pallas import tpu as pltpu

LN_EPS = 1e-5  # PyTorch nn.LayerNorm default


def _layernorm_cols(h, gamma, beta):
    """LayerNorm over axis 0 of an (F, td) slab; gamma/beta are (F, 1)."""
    mu = jnp.mean(h, axis=0, keepdims=True)
    var = jnp.mean(jnp.square(h - mu), axis=0, keepdims=True)
    return (h - mu) * jax.lax.rsqrt(var + LN_EPS) * gamma + beta


def temporal_ctx_kernel(*refs, act_on_last_layer):
    if act_on_last_layer:
        (x_ref, w1_ref, b1_ref, g1_ref, be1_ref,
         w2_ref, b2_ref, g2_ref, be2_ref, o_ref) = refs
    else:
        (x_ref, w1_ref, b1_ref, g1_ref, be1_ref,
         w2_ref, b2_ref, o_ref) = refs
        g2_ref = be2_ref = None

    # x_ref: (N, td) block of the (B, N, D) input (D-tile on the lane axis).
    x = x_ref[...].astype(jnp.float32)          # keep f32 copy for the residual
    x_bf = x.astype(jnp.bfloat16)               # bf16 operand for the MXU

    # tfcjoin1: h[k, d] = sum_n W1[k, n] * x[n, d] + b1[k]   (W1 in PyTorch (out,in) layout)
    h = jnp.dot(w1_ref[...], x_bf, preferred_element_type=jnp.float32) + b1_ref[...]
    h = jax.nn.gelu(h)                                        # activation1 (f32 on VPU/EUP)
    h = _layernorm_cols(h, g1_ref[...], be1_ref[...])         # temporal_norm1 over the 10N axis
    # d1: Dropout(p=0.1) -> identity at inference

    # tfcjoin2: y[m, d] = sum_k W2[m, k] * h[k, d] + b2[m]
    y = jnp.dot(w2_ref[...], h.astype(jnp.bfloat16),
                preferred_element_type=jnp.float32) + b2_ref[...]
    if act_on_last_layer:
        y = jax.nn.gelu(y)                                    # activation2
        y = _layernorm_cols(y, g2_ref[...], be2_ref[...])     # temporal_norm2 over the N axis
        # d2: identity at inference
        y = y + x                                             # residual with x_orig
    o_ref[...] = y.astype(o_ref.dtype)


def make_params(input_len, key):
    """Deterministic parameter init.  Weights kept in PyTorch (out, in) layout, bf16:
    w1: (10N, N), w2: (N, 10N).  Biases zero; LayerNorm gamma=1, beta=0 (all (F, 1) f32)."""
    n = input_len
    h = n * 10
    k1, k2 = jax.random.split(key)
    w1 = (jax.random.normal(k1, (h, n), jnp.float32) / jnp.sqrt(float(n))).astype(jnp.bfloat16)
    w2 = (jax.random.normal(k2, (n, h), jnp.float32) / jnp.sqrt(float(h))).astype(jnp.bfloat16)
    return dict(
        w1=w1, b1=jnp.zeros((h, 1), jnp.float32),
        w2=w2, b2=jnp.zeros((n, 1), jnp.float32),
        g1=jnp.ones((h, 1), jnp.float32), be1=jnp.zeros((h, 1), jnp.float32),
        g2=jnp.ones((n, 1), jnp.float32), be2=jnp.zeros((n, 1), jnp.float32),
    )


def _const_spec(shape, const_map):
    """BlockSpec for operands whose index is constant across the grid: single-buffer."""
    try:
        return pl.BlockSpec(shape, const_map, pipeline_mode=pl.Buffered(1))
    except TypeError:  # older API without pipeline_mode -> fall back to default buffering
        return pl.BlockSpec(shape, const_map)


def do_forward_pallas(x, params, act_on_last_layer=True, td=None):
    """x: (B, N, D) -> (B, N, D), equivalent to IndependentTemporalCTX.do_forward."""
    B, N, D = x.shape
    H = N * 10
    if td is None:
        td = 128 if D % 128 == 0 else D   # lane-dense feature tile when possible
    assert D % td == 0, "feature dim must be divisible by the chosen lane tile"
    grid = (B, D // td)

    const_map = lambda b, j: (0, 0)
    in_specs = [
        pl.BlockSpec((None, N, td), lambda b, j: (b, 0, j)),   # x block (N, td)
        _const_spec((H, N), const_map),                        # w1
        _const_spec((H, 1), const_map),                        # b1
        _const_spec((H, 1), const_map),                        # gamma1
        _const_spec((H, 1), const_map),                        # beta1
        _const_spec((N, H), const_map),                        # w2
        _const_spec((N, 1), const_map),                        # b2
    ]
    args = [x, params["w1"], params["b1"], params["g1"], params["be1"],
            params["w2"], params["b2"]]
    if act_on_last_layer:
        in_specs += [_const_spec((N, 1), const_map),           # gamma2
                     _const_spec((N, 1), const_map)]           # beta2
        args += [params["g2"], params["be2"]]

    # Explicit VMEM budget: bf16 weights (single-buffered) + LN params + double-buffered
    # x/out tiles + headroom for the (H, td) f32 intermediates.
    need = (2 * H * N * 2                      # w1 + w2 in bf16
            + (3 * H + 3 * N) * 4              # biases / gammas / betas
            + 2 * 2 * N * td * 4               # x & out tiles, double-buffered, f32
            + 4 * H * td * 4)                  # h intermediates / scratch headroom
    vmem_limit = int(min(max(4 * need, 32 << 20), 48 << 20))

    kernel = functools.partial(temporal_ctx_kernel,
                               act_on_last_layer=act_on_last_layer)
    out = pl.pallas_call(
        kernel,
        out_shape=jax.ShapeDtypeStruct((B, N, D), x.dtype),
        grid_spec=pltpu.PrefetchScalarGridSpec(
            num_scalar_prefetch=0,
            grid=grid,
            in_specs=in_specs,
            out_specs=pl.BlockSpec((None, N, td), lambda b, j: (b, 0, j)),
        ),
        compiler_params=pltpu.CompilerParams(
            dimension_semantics=("parallel", "parallel"),
            vmem_limit_bytes=vmem_limit),
    )(*args)
    return out


def independent_temporal_ctx_forward(x, y, params, act_on_last_layer=True):
    """Mirrors forward(x, y) -> (do_forward(x), do_forward(y))."""
    return (do_forward_pallas(x, params, act_on_last_layer),
            do_forward_pallas(y, params, act_on_last_layer))


def _reference_do_forward(x, params, act_on_last_layer=True):
    """Pure-JAX reference (mirrors the bf16-matmul / f32-elementwise numerics)."""
    xt = jnp.transpose(x, (0, 2, 1)).astype(jnp.float32)        # (B, D, N)
    b1 = params["b1"][:, 0]; g1 = params["g1"][:, 0]; be1 = params["be1"][:, 0]
    b2 = params["b2"][:, 0]; g2 = params["g2"][:, 0]; be2 = params["be2"][:, 0]

    h = jnp.dot(xt.astype(jnp.bfloat16), params["w1"].T,
                preferred_element_type=jnp.float32) + b1
    h = jax.nn.gelu(h)
    mu = jnp.mean(h, -1, keepdims=True)
    var = jnp.mean(jnp.square(h - mu), -1, keepdims=True)
    h = (h - mu) * jax.lax.rsqrt(var + LN_EPS) * g1 + be1

    y = jnp.dot(h.astype(jnp.bfloat16), params["w2"].T,
                preferred_element_type=jnp.float32) + b2
    if act_on_last_layer:
        y = jax.nn.gelu(y)
        mu = jnp.mean(y, -1, keepdims=True)
        var = jnp.mean(jnp.square(y - mu), -1, keepdims=True)
        y = (y - mu) * jax.lax.rsqrt(var + LN_EPS) * g2 + be2
        y = y + xt
    return jnp.transpose(y, (0, 2, 1)).astype(x.dtype)


if __name__ == "__main__":
    # batch=2, input_len (temporal/seq) N=8, feature dim D=256 (two lane tiles of 128).
    B, N, D = 2, 8, 256
    key = jax.random.PRNGKey(0)
    kx, ky, kp = jax.random.split(key, 3)
    x = jax.random.normal(kx, (B, N, D), jnp.float32)
    y = jax.random.normal(ky, (B, N, D), jnp.float32)

    params = make_params(N, kp)

    out_x, out_y = independent_temporal_ctx_forward(x, y, params,
                                                    act_on_last_layer=True)
    jax.block_until_ready((out_x, out_y))

    # sanity check against the pure-JAX reference
    ref_x = _reference_do_forward(x, params)
    ref_y = _reference_do_forward(y, params)
    assert out_x.shape == (B, N, D) and out_y.shape == (B, N, D)
    assert jnp.allclose(out_x, ref_x, atol=2e-2, rtol=2e-2)
    assert jnp.allclose(out_y, ref_y, atol=2e-2, rtol=2e-2)

    # also exercise the act_on_last_layer=False branch
    out_nf = do_forward_pallas(x, params, act_on_last_layer=False)
    ref_nf = _reference_do_forward(x, params, act_on_last_layer=False)
    jax.block_until_ready(out_nf)
    assert jnp.allclose(out_nf, ref_nf, atol=2e-2, rtol=2e-2)

    print("KERNEL_OK")
</pallas_src>

<mosaic_0001>
module attributes {stable_mosaic.version = 11 : i64} {
  func.func @temporal_ctx_kernel(%arg0: i32, %arg1: i32, %arg2: memref<1x8x128xf32, #tpu.memory_space<vmem>>, %arg3: memref<80x8xbf16, #tpu.memory_space<vmem>>, %arg4: memref<80x1xf32, #tpu.memory_space<vmem>>, %arg5: memref<80x1xf32, #tpu.memory_space<vmem>>, %arg6: memref<80x1xf32, #tpu.memory_space<vmem>>, %arg7: memref<8x80xbf16, #tpu.memory_space<vmem>>, %arg8: memref<8x1xf32, #tpu.memory_space<vmem>>, %arg9: memref<8x1xf32, #tpu.memory_space<vmem>>, %arg10: memref<8x1xf32, #tpu.memory_space<vmem>>, %arg11: memref<1x8x128xf32, #tpu.memory_space<vmem>>) attributes {dimension_semantics = [#tpu.dimension_semantics<parallel>, #tpu.dimension_semantics<parallel>], iteration_bounds = array<i64: 2, 2>, scalar_prefetch = 0 : i64, scratch_operands = 0 : i64, tpu.core_type = #tpu.core_type<tc>, window_params = [{transform_indices = @transform_0, window_bounds = array<i64: 1, 8, 128>}, {pipeline_mode = #tpu.pipeline_mode<synchronous>, transform_indices = @transform_1, window_bounds = array<i64: 80, 8>}, {pipeline_mode = #tpu.pipeline_mode<synchronous>, transform_indices = @transform_2, window_bounds = array<i64: 80, 1>}, {pipeline_mode = #tpu.pipeline_mode<synchronous>, transform_indices = @transform_3, window_bounds = array<i64: 80, 1>}, {pipeline_mode = #tpu.pipeline_mode<synchronous>, transform_indices = @transform_4, window_bounds = array<i64: 80, 1>}, {pipeline_mode = #tpu.pipeline_mode<synchronous>, transform_indices = @transform_5, window_bounds = array<i64: 8, 80>}, {pipeline_mode = #tpu.pipeline_mode<synchronous>, transform_indices = @transform_6, window_bounds = array<i64: 8, 1>}, {pipeline_mode = #tpu.pipeline_mode<synchronous>, transform_indices = @transform_7, window_bounds = array<i64: 8, 1>}, {pipeline_mode = #tpu.pipeline_mode<synchronous>, transform_indices = @transform_8, window_bounds = array<i64: 8, 1>}, {transform_indices = @transform_9, window_bounds = array<i64: 1, 8, 128>}]} {
    %c0 = arith.constant 0 : index
    %c0_0 = arith.constant 0 : index
    %c0_1 = arith.constant 0 : index
    %0 = vector.load %arg2[%c0, %c0_0, %c0_1] : memref<1x8x128xf32, #tpu.memory_space<vmem>>, vector<1x8x128xf32>
    %1 = vector.shape_cast %0 : vector<1x8x128xf32> to vector<8x128xf32>
    %2 = arith.truncf %1 : vector<8x128xf32> to vector<8x128xbf16>
    %c0_2 = arith.constant 0 : index
    %c0_3 = arith.constant 0 : index
    %3 = vector.load %arg3[%c0_2, %c0_3] : memref<80x8xbf16, #tpu.memory_space<vmem>>, vector<80x8xbf16>
    %cst = arith.constant dense<0.000000e+00> : vector<80x128xf32>
    %4 = tpu.matmul %3, %2, %cst {dimension_numbers = #tpu.dot_dimension_numbers<[1], [0], [0], [1], [0, 0, 1, 1], [], []>} : vector<80x8xbf16>, vector<8x128xbf16>, vector<80x128xf32> -> vector<80x128xf32>
    %c0_4 = arith.constant 0 : index
    %c0_5 = arith.constant 0 : index
    %5 = vector.load %arg4[%c0_4, %c0_5] : memref<80x1xf32, #tpu.memory_space<vmem>>, vector<80x1xf32>
    %6 = vector.broadcast %5 : vector<80x1xf32> to vector<80x128xf32>
    %7 = arith.addf %4, %6 : vector<80x128xf32>
    %8 = arith.mulf %7, %7 : vector<80x128xf32>
    %9 = arith.mulf %7, %8 : vector<80x128xf32>
    %cst_6 = arith.constant 4.471500e-02 : f32
    %10 = vector.broadcast %cst_6 : f32 to vector<80x128xf32>
    %11 = arith.mulf %10, %9 : vector<80x128xf32>
    %12 = arith.addf %7, %11 : vector<80x128xf32>
    %cst_7 = arith.constant 0.797884583 : f32
    %13 = vector.broadcast %cst_7 : f32 to vector<80x128xf32>
    %14 = arith.mulf %13, %12 : vector<80x128xf32>
    %15 = math.tanh %14 : vector<80x128xf32>
    %cst_8 = arith.constant 1.000000e+00 : f32
    %16 = vector.broadcast %cst_8 : f32 to vector<80x128xf32>
    %17 = arith.addf %16, %15 : vector<80x128xf32>
    %cst_9 = arith.constant 5.000000e-01 : f32
    %18 = vector.broadcast %cst_9 : f32 to vector<80x128xf32>
    %19 = arith.mulf %18, %17 : vector<80x128xf32>
    %20 = arith.mulf %7, %19 : vector<80x128xf32>
    %c0_10 = arith.constant 0 : index
    %c0_11 = arith.constant 0 : index
    %21 = vector.load %arg5[%c0_10, %c0_11] : memref<80x1xf32, #tpu.memory_space<vmem>>, vector<80x1xf32>
    %c0_12 = arith.constant 0 : index
    %c0_13 = arith.constant 0 : index
    %22 = vector.load %arg6[%c0_12, %c0_13] : memref<80x1xf32, #tpu.memory_space<vmem>>, vector<80x1xf32>
    %cst_14 = arith.constant dense<0.000000e+00> : vector<128xf32>
    %23 = vector.multi_reduction <add>, %20, %cst_14 [0] : vector<80x128xf32> to vector<128xf32>
    %24 = vector.shape_cast %23 : vector<128xf32> to vector<1x128xf32>
    %cst_15 = arith.constant 8.000000e+01 : f32
    %25 = vector.broadcast %cst_15 : f32 to vector<1x128xf32>
    %26 = arith.divf %24, %25 : vector<1x128xf32>
    %27 = vector.broadcast %26 : vector<1x128xf32> to vector<80x128xf32>
    %28 = arith.subf %20, %27 : vector<80x128xf32>
    %29 = arith.mulf %28, %28 : vector<80x128xf32>
    %cst_16 = arith.constant dense<0.000000e+00> : vector<128xf32>
    %30 = vector.multi_reduction <add>, %29, %cst_16 [0] : vector<80x128xf32> to vector<128xf32>
    %31 = vector.shape_cast %30 : vector<128xf32> to vector<1x128xf32>
    %cst_17 = arith.constant 8.000000e+01 : f32
    %32 = vector.broadcast %cst_17 : f32 to vector<1x128xf32>
    %33 = arith.divf %31, %32 : vector<1x128xf32>
    %34 = vector.broadcast %26 : vector<1x128xf32> to vector<80x128xf32>
    %35 = arith.subf %20, %34 : vector<80x128xf32>
    %cst_18 = arith.constant 9.99999974E-6 : f32
    %36 = vector.broadcast %cst_18 : f32 to vector<1x128xf32>
    %37 = arith.addf %33, %36 : vector<1x128xf32>
    %38 = math.rsqrt %37 : vector<1x128xf32>
    %39 = vector.broadcast %38 : vector<1x128xf32> to vector<80x128xf32>
    %40 = arith.mulf %35, %39 : vector<80x128xf32>
    %41 = vector.broadcast %21 : vector<80x1xf32> to vector<80x128xf32>
    %42 = arith.mulf %40, %41 : vector<80x128xf32>
    %43 = vector.broadcast %22 : vector<80x1xf32> to vector<80x128xf32>
    %44 = arith.addf %42, %43 : vector<80x128xf32>
    %c0_19 = arith.constant 0 : index
    %c0_20 = arith.constant 0 : index
    %45 = vector.load %arg7[%c0_19, %c0_20] : memref<8x80xbf16, #tpu.memory_space<vmem>>, vector<8x80xbf16>
    %46 = arith.truncf %44 : vector<80x128xf32> to vector<80x128xbf16>
    %cst_21 = arith.constant dense<0.000000e+00> : vector<8x128xf32>
    %47 = tpu.matmul %45, %46, %cst_21 {dimension_numbers = #tpu.dot_dimension_numbers<[1], [0], [0], [1], [0, 0, 1, 1], [], []>} : vector<8x80xbf16>, vector<80x128xbf16>, vector<8x128xf32> -> vector<8x128xf32>
    %c0_22 = arith.constant 0 : index
    %c0_23 = arith.constant 0 : index
    %48 = vector.load %arg8[%c0_22, %c0_23] : memref<8x1xf32, #tpu.memory_space<vmem>>, vector<8x1xf32>
    %49 = vector.broadcast %48 : vector<8x1xf32> to vector<8x128xf32>
    %50 = arith.addf %47, %49 : vector<8x128xf32>
    %51 = arith.mulf %50, %50 : vector<8x128xf32>
    %52 = arith.mulf %50, %51 : vector<8x128xf32>
    %cst_24 = arith.constant 4.471500e-02 : f32
    %53 = vector.broadcast %cst_24 : f32 to vector<8x128xf32>
    %54 = arith.mulf %53, %52 : vector<8x128xf32>
    %55 = arith.addf %50, %54 : vector<8x128xf32>
    %cst_25 = arith.constant 0.797884583 : f32
    %56 = vector.broadcast %cst_25 : f32 to vector<8x128xf32>
    %57 = arith.mulf %56, %55 : vector<8x128xf32>
    %58 = math.tanh %57 : vector<8x128xf32>
    %cst_26 = arith.constant 1.000000e+00 : f32
    %59 = vector.broadcast %cst_26 : f32 to vector<8x128xf32>
    %60 = arith.addf %59, %58 : vector<8x128xf32>
    %cst_27 = arith.constant 5.000000e-01 : f32
    %61 = vector.broadcast %cst_27 : f32 to vector<8x128xf32>
    %62 = arith.mulf %61, %60 : vector<8x128xf32>
    %63 = arith.mulf %50, %62 : vector<8x128xf32>
    %c0_28 = arith.constant 0 : index
    %c0_29 = arith.constant 0 : index
    %64 = vector.load %arg9[%c0_28, %c0_29] : memref<8x1xf32, #tpu.memory_space<vmem>>, vector<8x1xf32>
    %c0_30 = arith.constant 0 : index
    %c0_31 = arith.constant 0 : index
    %65 = vector.load %arg10[%c0_30, %c0_31] : memref<8x1xf32, #tpu.memory_space<vmem>>, vector<8x1xf32>
    %cst_32 = arith.constant dense<0.000000e+00> : vector<128xf32>
    %66 = vector.multi_reduction <add>, %63, %cst_32 [0] : vector<8x128xf32> to vector<128xf32>
    %67 = vector.shape_cast %66 : vector<128xf32> to vector<1x128xf32>
    %cst_33 = arith.constant 8.000000e+00 : f32
    %68 = vector.broadcast %cst_33 : f32 to vector<1x128xf32>
    %69 = arith.divf %67, %68 : vector<1x128xf32>
    %70 = vector.broadcast %69 : vector<1x128xf32> to vector<8x128xf32>
    %71 = arith.subf %63, %70 : vector<8x128xf32>
    %72 = arith.mulf %71, %71 : vector<8x128xf32>
    %cst_34 = arith.constant dense<0.000000e+00> : vector<128xf32>
    %73 = vector.multi_reduction <add>, %72, %cst_34 [0] : vector<8x128xf32> to vector<128xf32>
    %74 = vector.shape_cast %73 : vector<128xf32> to vector<1x128xf32>
    %cst_35 = arith.constant 8.000000e+00 : f32
    %75 = vector.broadcast %cst_35 : f32 to vector<1x128xf32>
    %76 = arith.divf %74, %75 : vector<1x128xf32>
    %77 = vector.broadcast %69 : vector<1x128xf32> to vector<8x128xf32>
    %78 = arith.subf %63, %77 : vector<8x128xf32>
    %cst_36 = arith.constant 9.99999974E-6 : f32
    %79 = vector.broadcast %cst_36 : f32 to vector<1x128xf32>
    %80 = arith.addf %76, %79 : vector<1x128xf32>
    %81 = math.rsqrt %80 : vector<1x128xf32>
    %82 = vector.broadcast %81 : vector<1x128xf32> to vector<8x128xf32>
    %83 = arith.mulf %78, %82 : vector<8x128xf32>
    %84 = vector.broadcast %64 : vector<8x1xf32> to vector<8x128xf32>
    %85 = arith.mulf %83, %84 : vector<8x128xf32>
    %86 = vector.broadcast %65 : vector<8x1xf32> to vector<8x128xf32>
    %87 = arith.addf %85, %86 : vector<8x128xf32>
    %88 = arith.addf %87, %1 : vector<8x128xf32>
    %c0_37 = arith.constant 0 : index
    %c0_38 = arith.constant 0 : index
    %c0_39 = arith.constant 0 : index
    %89 = vector.load %arg11[%c0_37, %c0_38, %c0_39] : memref<1x8x128xf32, #tpu.memory_space<vmem>>, vector<1x8x128xf32>
    %90 = vector.shape_cast %89 : vector<1x8x128xf32> to vector<8x128xf32>
    %91 = vector.shape_cast %88 : vector<8x128xf32> to vector<1x8x128xf32>
    tpu.vector_store %arg11[%c0_37, %c0_38, %c0_39], %91 {strides = array<i32>} : memref<1x8x128xf32, #tpu.memory_space<vmem>>, vector<1x8x128xf32>,
    return
  }
  func.func @transform_0(%arg0: i32, %arg1: i32) -> (i32, i32, i32) {
    %c0_i32 = arith.constant 0 : i32
    %c0_i32_0 = arith.constant 0 : i32
    return %arg0, %c0_i32, %arg1 : i32, i32, i32
  }
  func.func @transform_1(%arg0: i32, %arg1: i32) -> (i32, i32) {
    %c0_i32 = arith.constant 0 : i32
    %c0_i32_0 = arith.constant 0 : i32
    %c0_i32_1 = arith.constant 0 : i32
    return %c0_i32, %c0_i32_0 : i32, i32
  }
  func.func @transform_2(%arg0: i32, %arg1: i32) -> (i32, i32) {
    %c0_i32 = arith.constant 0 : i32
    %c0_i32_0 = arith.constant 0 : i32
    %c0_i32_1 = arith.constant 0 : i32
    return %c0_i32, %c0_i32_0 : i32, i32
  }
  func.func @transform_3(%arg0: i32, %arg1: i32) -> (i32, i32) {
    %c0_i32 = arith.constant 0 : i32
    %c0_i32_0 = arith.constant 0 : i32
    %c0_i32_1 = arith.constant 0 : i32
    return %c0_i32, %c0_i32_0 : i32, i32
  }
  func.func @transform_4(%arg0: i32, %arg1: i32) -> (i32, i32) {
    %c0_i32 = arith.constant 0 : i32
    %c0_i32_0 = arith.constant 0 : i32
    %c0_i32_1 = arith.constant 0 : i32
    return %c0_i32, %c0_i32_0 : i32, i32
  }
  func.func @transform_5(%arg0: i32, %arg1: i32) -> (i32, i32) {
    %c0_i32 = arith.constant 0 : i32
    %c0_i32_0 = arith.constant 0 : i32
    %c0_i32_1 = arith.constant 0 : i32
    return %c0_i32, %c0_i32_0 : i32, i32
  }
  func.func @transform_6(%arg0: i32, %arg1: i32) -> (i32, i32) {
    %c0_i32 = arith.constant 0 : i32
    %c0_i32_0 = arith.constant 0 : i32
    %c0_i32_1 = arith.constant 0 : i32
    return %c0_i32, %c0_i32_0 : i32, i32
  }
  func.func @transform_7(%arg0: i32, %arg1: i32) -> (i32, i32) {
    %c0_i32 = arith.constant 0 : i32
    %c0_i32_0 = arith.constant 0 : i32
    %c0_i32_1 = arith.constant 0 : i32
    return %c0_i32, %c0_i32_0 : i32, i32
  }
  func.func @transform_8(%arg0: i32, %arg1: i32) -> (i32, i32) {
    %c0_i32 = arith.constant 0 : i32
    %c0_i32_0 = arith.constant 0 : i32
    %c0_i32_1 = arith.constant 0 : i32
    return %c0_i32, %c0_i32_0 : i32, i32
  }
  func.func @transform_9(%arg0: i32, %arg1: i32) -> (i32, i32, i32) {
    %c0_i32 = arith.constant 0 : i32
    %c0_i32_0 = arith.constant 0 : i32
    return %arg0, %c0_i32, %arg1 : i32, i32, i32
  }
}

</mosaic_0001>

<llo_original>
// kernel: tpu_custom_call.1
$region0: #{tpu_custom_call.1}
  #allocation0 [shape = 'u32[]', space=smem, size = 0x4, offset = 0x4, fixed_abs, tag = 'smem constant byte address 0x4 - core index']
  #allocation1 [shape = 'u32[72,128]{1,0:T(1,128)}', space=vmem, size = 0x9000, scoped, tag = 'internal scratch']
  %s0 = inlined_call_operand.vmem [shape: f32[2,8,256], index: 0, kind: input, shape index: {}]
  %s1 = inlined_call_operand.vmem [shape: bf16[80,8], index: 1, kind: input, shape index: {}]
  %s2 = inlined_call_operand.vmem [shape: f32[80,1], index: 2, kind: input, shape index: {}]
  %s3 = inlined_call_operand.vmem [shape: f32[80,1], index: 3, kind: input, shape index: {}]
  %s4 = inlined_call_operand.vmem [shape: f32[80,1], index: 4, kind: input, shape index: {}]
  %s5 = inlined_call_operand.vmem [shape: bf16[8,80], index: 5, kind: input, shape index: {}]
  %s6 = inlined_call_operand.vmem [shape: f32[8,1], index: 6, kind: input, shape index: {}]
  %s7 = inlined_call_operand.vmem [shape: f32[8,1], index: 7, kind: input, shape index: {}]
  %s8 = inlined_call_operand.vmem [shape: f32[8,1], index: 8, kind: input, shape index: {}]
  %s9 = inlined_call_operand.hbm [shape: f32[2,8,256], index: 9, kind: output, shape index: {}]
  %s10 = sld [smem:[#allocation0]]
  $region69: #{tpu_custom_call.1} parent=0
    _
  %s12 = ssub.s32 1, %s10
  %s13 = scalar_select 0, %s12, %s10
  $region1: #{tpu_custom_call.1} parent=0
    #allocation2 [shape = 'u8[8192]{0}', space=vmem, size = 0x2000, scoped, tag = 'output window, operand 0']
    #allocation3 [shape = 's32[2]{0}', space=sflag, size = 0x8, scoped, tag = 'scoped memory for tpu_custom_call.1']
    %14 = vsyncpa [#allocation3], 0
    %s15 = scalar_lea.sflag [#allocation3], 1
    %16 = vsyncpa %s15, 0
    loop: start=0, step=1, limit=6
    $region2: #{tpu_custom_call.1} parent=1 // loop_pre_header
      _
    $region3: #{tpu_custom_call.1} parent=1 // loop_header
      %s18 = sphi 0, %s22
      %p19 = scmp.ge.s32.totalorder %s18, 6
      %s25 = sphi 0, %s37
      %s26 = sphi 0, %s33
      %s27 = sphi 0, %s25
      %s28 = sphi 0, %s26
      %s29 = sphi 0, %s27
      %s30 = sphi 0, %s28
      %s42 = sphi 0, %s44
      %s45 = sphi 0, %s42
      %s46 = sphi 0, %s45
      %s62 = sphi 0, %s46
      %s66 = sphi 0, %s66
      %s68 = sphi 0, %s66
      %s69 = sphi 0, %s68
      %s83 = sphi 0, %s69
      %s87 = sphi 0, %s87
      %s89 = sphi 0, %s87
      %s90 = sphi 0, %s89
      %s104 = sphi 0, %s90
      %s108 = sphi 0, %s108
      %s110 = sphi 0, %s108
      %s111 = sphi 0, %s110
      %s125 = sphi 0, %s111
      %s129 = sphi 0, %s129
      %s131 = sphi 0, %s129
      %s132 = sphi 0, %s131
      %s146 = sphi 0, %s132
      %s150 = sphi 0, %s150
      %s152 = sphi 0, %s150
      %s153 = sphi 0, %s152
      %s167 = sphi 0, %s153
      %s171 = sphi 0, %s171
      %s173 = sphi 0, %s171
      %s174 = sphi 0, %s173
      %s188 = sphi 0, %s174
      %s192 = sphi 0, %s192
      %s194 = sphi 0, %s192
      %s195 = sphi 0, %s194
      %s209 = sphi 0, %s195
      %s213 = sphi 0, %s213
      %s215 = sphi 0, %s213
      %s216 = sphi 0, %s215
      %s230 = sphi 0, %s216
      %s238 = sphi 0, %s240
      %s241 = sphi 0, %s238
      %s242 = sphi 0, %s241
      %s258 = sphi 0, %s242
    $region4: #{tpu_custom_call.1} parent=1 // loop_header_branch
      %21 = sbr.rel (%p19) target = $region8
    $region5: #{tpu_custom_call.1} parent=1 // loop_body
      %s23 = ssub.s32 %s18, 1
      %s24 = ssub.s32 %s18, 2
      %s31 = sadd.s32 1, %s26
      %p32 = scmp.ge.s32.totalorder %s31, 2
      %s33 = scalar_select %p32, 0, %s31
      %s34 = sadd.s32 1, %s25
      %s35 = scalar_select %p32, %s34, %s25
      %p36 = scmp.ge.s32.totalorder %s35, 2
      %s37 = scalar_select %p36, 0, %s35
      %s38 = ssub.s32 %s25, %s37
      %s39 = ssub.s32 %s26, %s33
      %s40 = sor.u32 %s38, %s39
      %p41 = scmp.eq.s32.totalorder %s40, 0
      %s43 = sadd.s32 %s42, 1
      %s44 = scalar_select %p41, %s42, %s43
      %p47 = pneg %p41
      %p48 = scmp.eq.s32.totalorder %s18, 3
      %p49 = por %p47, %p48
      %p50 = scmp.ne.s32.totalorder %s42, %s45
      %p51 = scmp.eq.s32.totalorder %s18, 0
      %p52 = por %p50, %p51
      %p53 = scmp.ne.s32.totalorder %s42, %s45
      %p54 = scmp.eq.s32.totalorder %s23, 3
      %p55 = por %p53, %p54
      %p56 = scmp.ne.s32.totalorder %s45, %s46
      %p57 = scmp.eq.s32.totalorder %s23, 0
      %p58 = por %p56, %p57
      %p59 = scmp.ne.s32.totalorder %s45, %s46
      %p60 = scmp.eq.s32.totalorder %s24, 3
      %p61 = por %p59, %p60
      %p63 = scmp.ne.s32.totalorder %s46, %s62
      %p64 = scmp.eq.s32.totalorder %s24, 0
      %p65 = por %p63, %p64
      %s67 = sadd.s32 %s66, 1
      %p70 = scmp.eq.s32.totalorder %s18, 3
      %p71 = scmp.ne.s32.totalorder %s66, %s68
      %p72 = scmp.eq.s32.totalorder %s18, 0
      %p73 = por %p71, %p72
      %p74 = scmp.ne.s32.totalorder %s66, %s68
      %p75 = scmp.eq.s32.totalorder %s23, 3
      %p76 = por %p74, %p75
      %p77 = scmp.ne.s32.totalorder %s68, %s69
      %p78 = scmp.eq.s32.totalorder %s23, 0
      %p79 = por %p77, %p78
      %p80 = scmp.ne.s32.totalorder %s68, %s69
      %p81 = scmp.eq.s32.totalorder %s24, 3
      %p82 = por %p80, %p81
      %p84 = scmp.ne.s32.totalorder %s69, %s83
      %p85 = scmp.eq.s32.totalorder %s24, 0
      %p86 = por %p84, %p85
      %s88 = sadd.s32 %s87, 1
      %p91 = scmp.eq.s32.totalorder %s18, 3
      %p92 = scmp.ne.s32.totalorder %s87, %s89
      %p93 = scmp.eq.s32.totalorder %s18, 0
      %p94 = por %p92, %p93
      %p95 = scmp.ne.s32.totalorder %s87, %s89
      %p96 = scmp.eq.s32.totalorder %s23, 3
      %p97 = por %p95, %p96
      %p98 = scmp.ne.s32.totalorder %s89, %s90
      %p99 = scmp.eq.s32.totalorder %s23, 0
      %p100 = por %p98, %p99
      %p101 = scmp.ne.s32.totalorder %s89, %s90
      %p102 = scmp.eq.s32.totalorder %s24, 3
      %p103 = por %p101, %p102
      %p105 = scmp.ne.s32.totalorder %s90, %s104
      %p106 = scmp.eq.s32.totalorder %s24, 0
      %p107 = por %p105, %p106
      %s109 = sadd.s32 %s108, 1
      %p112 = scmp.eq.s32.totalorder %s18, 3
      %p113 = scmp.ne.s32.totalorder %s108, %s110
      %p114 = scmp.eq.s32.totalorder %s18, 0
      %p115 = por %p113, %p114
      %p116 = scmp.ne.s32.totalorder %s108, %s110
      %p117 = scmp.eq.s32.totalorder %s23, 3
      %p118 = por %p116, %p117
      %p119 = scmp.ne.s32.totalorder %s110, %s111
      %p120 = scmp.eq.s32.totalorder %s23, 0
      %p121 = por %p119, %p120
      %p122 = scmp.ne.s32.totalorder %s110, %s111
      %p123 = scmp.eq.s32.totalorder %s24, 3
      %p124 = por %p122, %p123
      %p126 = scmp.ne.s32.totalorder %s111, %s125
      %p127 = scmp.eq.s32.totalorder %s24, 0
      %p128 = por %p126, %p127
      %s130 = sadd.s32 %s129, 1
      %p133 = scmp.eq.s32.totalorder %s18, 3
      %p134 = scmp.ne.s32.totalorder %s129, %s131
      %p135 = scmp.eq.s32.totalorder %s18, 0
      %p136 = por %p134, %p135
      %p137 = scmp.ne.s32.totalorder %s129, %s131
      %p138 = scmp.eq.s32.totalorder %s23, 3
      %p139 = por %p137, %p138
      %p140 = scmp.ne.s32.totalorder %s131, %s132
      %p141 = scmp.eq.s32.totalorder %s23, 0
      %p142 = por %p140, %p141
      %p143 = scmp.ne.s32.totalorder %s131, %s132
      %p144 = scmp.eq.s32.totalorder %s24, 3
      %p145 = por %p143, %p144
      %p147 = scmp.ne.s32.totalorder %s132, %s146
      %p148 = scmp.eq.s32.totalorder %s24, 0
      %p149 = por %p147, %p148
      %s151 = sadd.s32 %s150, 1
      %p154 = scmp.eq.s32.totalorder %s18, 3
      %p155 = scmp.ne.s32.totalorder %s150, %s152
      %p156 = scmp.eq.s32.totalorder %s18, 0
      %p157 = por %p155, %p156
      %p158 = scmp.ne.s32.totalorder %s150, %s152
      %p159 = scmp.eq.s32.totalorder %s23, 3
      %p160 = por %p158, %p159
      %p161 = scmp.ne.s32.totalorder %s152, %s153
      %p162 = scmp.eq.s32.totalorder %s23, 0
      %p163 = por %p161, %p162
      %p164 = scmp.ne.s32.totalorder %s152, %s153
      %p165 = scmp.eq.s32.totalorder %s24, 3
      %p166 = por %p164, %p165
      %p168 = scmp.ne.s32.totalorder %s153, %s167
      %p169 = scmp.eq.s32.totalorder %s24, 0
      %p170 = por %p168, %p169
      %s172 = sadd.s32 %s171, 1
      %p175 = scmp.eq.s32.totalorder %s18, 3
      %p176 = scmp.ne.s32.totalorder %s171, %s173
      %p177 = scmp.eq.s32.totalorder %s18, 0
      %p178 = por %p176, %p177
      %p179 = scmp.ne.s32.totalorder %s171, %s173
      %p180 = scmp.eq.s32.totalorder %s23, 3
      %p181 = por %p179, %p180
      %p182 = scmp.ne.s32.totalorder %s173, %s174
      %p183 = scmp.eq.s32.totalorder %s23, 0
      %p184 = por %p182, %p183
      %p185 = scmp.ne.s32.totalorder %s173, %s174
      %p186 = scmp.eq.s32.totalorder %s24, 3
      %p187 = por %p185, %p186
      %p189 = scmp.ne.s32.totalorder %s174, %s188
      %p190 = scmp.eq.s32.totalorder %s24, 0
      %p191 = por %p189, %p190
      %s193 = sadd.s32 %s192, 1
      %p196 = scmp.eq.s32.totalorder %s18, 3
      %p197 = scmp.ne.s32.totalorder %s192, %s194
      %p198 = scmp.eq.s32.totalorder %s18, 0
      %p199 = por %p197, %p198
      %p200 = scmp.ne.s32.totalorder %s192, %s194
      %p201 = scmp.eq.s32.totalorder %s23, 3
      %p202 = por %p200, %p201
      %p203 = scmp.ne.s32.totalorder %s194, %s195
      %p204 = scmp.eq.s32.totalorder %s23, 0
      %p205 = por %p203, %p204
      %p206 = scmp.ne.s32.totalorder %s194, %s195
      %p207 = scmp.eq.s32.totalorder %s24, 3
      %p208 = por %p206, %p207
      %p210 = scmp.ne.s32.totalorder %s195, %s209
      %p211 = scmp.eq.s32.totalorder %s24, 0
      %p212 = por %p210, %p211
      %s214 = sadd.s32 %s213, 1
      %p217 = scmp.eq.s32.totalorder %s18, 3
      %p218 = scmp.ne.s32.totalorder %s213, %s215
      %p219 = scmp.eq.s32.totalorder %s18, 0
      %p220 = por %p218, %p219
      %p221 = scmp.ne.s32.totalorder %s213, %s215
      %p222 = scmp.eq.s32.totalorder %s23, 3
      %p223 = por %p221, %p222
      %p224 = scmp.ne.s32.totalorder %s215, %s216
      %p225 = scmp.eq.s32.totalorder %s23, 0
      %p226 = por %p224, %p225
      %p227 = scmp.ne.s32.totalorder %s215, %s216
      %p228 = scmp.eq.s32.totalorder %s24, 3
      %p229 = por %p227, %p228
      %p231 = scmp.ne.s32.totalorder %s216, %s230
      %p232 = scmp.eq.s32.totalorder %s24, 0
      %p233 = por %p231, %p232
      %s234 = ssub.s32 %s25, %s37
      %s235 = ssub.s32 %s26, %s33
      %s236 = sor.u32 %s234, %s235
      %p237 = scmp.eq.s32.totalorder %s236, 0
      %s239 = sadd.s32 %s238, 1
      %s240 = scalar_select %p237, %s238, %s239
      %p243 = pneg %p237
      %p244 = scmp.eq.s32.totalorder %s18, 3
      %p245 = por %p243, %p244
      %p246 = scmp.ne.s32.totalorder %s238, %s241
      %p247 = scmp.eq.s32.totalorder %s18, 0
      %p248 = por %p246, %p247
      %p249 = scmp.ne.s32.totalorder %s238, %s241
      %p250 = scmp.eq.s32.totalorder %s23, 3
      %p251 = por %p249, %p250
      %p252 = scmp.ne.s32.totalorder %s241, %s242
      %p253 = scmp.eq.s32.totalorder %s23, 0
      %p254 = por %p252, %p253
      %p255 = scmp.ne.s32.totalorder %s241, %s242
      %p256 = scmp.eq.s32.totalorder %s24, 3
      %p257 = por %p255, %p256
      %p259 = scmp.ne.s32.totalorder %s242, %s258
      %p260 = scmp.eq.s32.totalorder %s24, 0
      %p261 = por %p259, %p260
      %p262 = scmp.le.s32.totalorder 1, %s18
      %p263 = scmp.lt.s32.totalorder %s18, 5
      %p264 = pnand %p262, %p263
      %p265 = pneg %p264
      // Predicated region
      $region9: #{tpu_custom_call.1} parent=5 // pred_check
        _
      $region10: #{tpu_custom_call.1} parent=5 // pred_check_branch
        %267 = sbr.rel (%p264) target = $region12
      $region11: #{tpu_custom_call.1} parent=5 // pred_region
        %s268 = ssub.s32 %s18, 1
        // Predicated region
        $region13: #{tpu_custom_call.1} parent=11 // pred_check
          %p269 = pneg %p79
        $region14: #{tpu_custom_call.1} parent=11 // pred_check_branch
          %271 = sbr.rel (%p269) target = $region16
        $region15: #{tpu_custom_call.1} parent=11 // pred_region
          _
        $region16: #{tpu_custom_call.1} parent=11 // pred_fallthru
          _
        // Predicated region
        $region17: #{tpu_custom_call.1} parent=11 // pred_check
          %p272 = pneg %p100
        $region18: #{tpu_custom_call.1} parent=11 // pred_check_branch
          %274 = sbr.rel (%p272) target = $region20
        $region19: #{tpu_custom_call.1} parent=11 // pred_region
          _
        $region20: #{tpu_custom_call.1} parent=11 // pred_fallthru
          _
        // Predicated region
        $region21: #{tpu_custom_call.1} parent=11 // pred_check
          %p275 = pneg %p121
        $region22: #{tpu_custom_call.1} parent=11 // pred_check_branch
          %277 = sbr.rel (%p275) target = $region24
        $region23: #{tpu_custom_call.1} parent=11 // pred_region
          _
        $region24: #{tpu_custom_call.1} parent=11 // pred_fallthru
          _
        // Predicated region
        $region25: #{tpu_custom_call.1} parent=11 // pred_check
          %p278 = pneg %p142
        $region26: #{tpu_custom_call.1} parent=11 // pred_check_branch
          %280 = sbr.rel (%p278) target = $region28
        $region27: #{tpu_custom_call.1} parent=11 // pred_region
          _
        $region28: #{tpu_custom_call.1} parent=11 // pred_fallthru
          _
        // Predicated region
        $region29: #{tpu_custom_call.1} parent=11 // pred_check
          %p281 = pneg %p163
        $region30: #{tpu_custom_call.1} parent=11 // pred_check_branch
          %283 = sbr.rel (%p281) target = $region32
        $region31: #{tpu_custom_call.1} parent=11 // pred_region
          _
        $region32: #{tpu_custom_call.1} parent=11 // pred_fallthru
          _
        // Predicated region
        $region33: #{tpu_custom_call.1} parent=11 // pred_check
          %p284 = pneg %p184
        $region34: #{tpu_custom_call.1} parent=11 // pred_check_branch
          %286 = sbr.rel (%p284) target = $region36
        $region35: #{tpu_custom_call.1} parent=11 // pred_region
          _
        $region36: #{tpu_custom_call.1} parent=11 // pred_fallthru
          _
        // Predicated region
        $region37: #{tpu_custom_call.1} parent=11 // pred_check
          %p287 = pneg %p205
        $region38: #{tpu_custom_call.1} parent=11 // pred_check_branch
          %289 = sbr.rel (%p287) target = $region40
        $region39: #{tpu_custom_call.1} parent=11 // pred_region
          _
        $region40: #{tpu_custom_call.1} parent=11 // pred_fallthru
          _
        // Predicated region
        $region41: #{tpu_custom_call.1} parent=11 // pred_check
          %p290 = pneg %p226
        $region42: #{tpu_custom_call.1} parent=11 // pred_check_branch
          %292 = sbr.rel (%p290) target = $region44
        $region43: #{tpu_custom_call.1} parent=11 // pred_region
          _
        $region44: #{tpu_custom_call.1} parent=11 // pred_fallthru
          _
      $region12: #{tpu_custom_call.1} parent=5 // pred_fallthru
        _
      %p293 = scmp.lt.s32.totalorder %s18, 4
      // Predicated region
      $region45: #{tpu_custom_call.1} parent=5 // pred_check
        %p294 = pneg %p293
      $region46: #{tpu_custom_call.1} parent=5 // pred_check_branch
        %296 = sbr.rel (%p294) target = $region48
      $region47: #{tpu_custom_call.1} parent=5 // pred_region
        // Predicated region
        $region49: #{tpu_custom_call.1} parent=47 // pred_check
          %p297 = pneg %p52
        $region50: #{tpu_custom_call.1} parent=47 // pred_check_branch
          %299 = sbr.rel (%p297) target = $region52
        $region51: #{tpu_custom_call.1} parent=47 // pred_region
          %p300 = scmp.lt.s32.totalorder %s25, 1
          %s301 = scalar_select %p300, %s25, 1
          %p302 = scmp.lt.s32.totalorder %s26, 1
          %s303 = scalar_select %p302, %s26, 1
          %s304 = smul.addr %s301, 2
          %s305 = sadd.s32 %s303, %s304
          %s306 = smul.addr %s305, 8
          %s307 = scalar_lea.vmem %s0, %s306
        $region52: #{tpu_custom_call.1} parent=47 // pred_fallthru
          _
      $region48: #{tpu_custom_call.1} parent=5 // pred_fallthru
        _
      %p308 = scmp.le.s32.totalorder 1, %s18
      %p309 = scmp.lt.s32.totalorder %s18, 5
      %p310 = pnand %p308, %p309
      %p311 = pneg %p310
      // Predicated region
      $region53: #{tpu_custom_call.1} parent=5 // pred_check
        _
      $region54: #{tpu_custom_call.1} parent=5 // pred_check_branch
        %313 = sbr.rel (%p310) target = $region56
      $region55: #{tpu_custom_call.1} parent=5 // pred_region
        %s314 = ssub.s32 %s18, 1
        %p315 = scmp.lt.s32.totalorder %s27, 1
        %s316 = scalar_select %p315, %s27, 1
        %p317 = scmp.lt.s32.totalorder %s28, 1
        %s318 = scalar_select %p317, %s28, 1
        %s319 = smul.addr %s316, 2
        %s320 = sadd.s32 %s318, %s319
        %s321 = smul.addr %s320, 8
        %s322 = scalar_lea.vmem %s0, %s321
        %p323 = pneg %p58
        %p324 = pneg %p55
        %p325 = pneg %p79
        %p326 = pneg %p76
        %p327 = pneg %p100
        %p328 = pneg %p97
        %p329 = pneg %p121
        %p330 = pneg %p118
        %p331 = pneg %p142
        %p332 = pneg %p139
        %p333 = pneg %p163
        %p334 = pneg %p160
        %p335 = pneg %p184
        %p336 = pneg %p181
        %p337 = pneg %p205
        %p338 = pneg %p202
        %p339 = pneg %p226
        %p340 = pneg %p223
        %p341 = pneg %p254
        %p342 = pneg %p251
        %s343 = sand.u32 %s241, 1
        %s344 = scalar_lea.sflag [#allocation3], %s343
        %s345 = sand.u32 %s241, 1
        %s346 = smul.addr %s345, 8
        %s347 = scalar_lea.vmem [#allocation2], %s346
        %p348 = scmp.lt.s32.totalorder %s27, 1
        %s349 = scalar_select %p348, %s27, 1
        %p350 = scmp.lt.s32.totalorder %s28, 1
        %s351 = scalar_select %p350, %s28, 1
        %s352 = smul.addr %s349, 2
        %s353 = sadd.s32 %s351, %s352
        %s354 = smul.addr %s353, 8
        %s355 = scalar_lea.vmem %s0, %s354
        %v357 = vld [vmem:[%s355] sm:$0xff]
        %v358 = vpack.c.bf16 %v357, %v357
        %v359 = vld [vmem:[%s1] sm:$0xf]
        %v360 = vld [vmem:[%s1 + $0x4] sm:$0xf]
        %v361 = vld [vmem:[%s1 + $0x8] sm:$0xf]
        %v362 = vld [vmem:[%s1 + $0xc] sm:$0xf]
        %v363 = vld [vmem:[%s1 + $0x10] sm:$0xf]
        %v364 = vld [vmem:[%s1 + $0x14] sm:$0xf]
        %v365 = vld [vmem:[%s1 + $0x18] sm:$0xf]
        %v366 = vld [vmem:[%s1 + $0x1c] sm:$0xf]
        %v367 = vld [vmem:[%s1 + $0x20] sm:$0xf]
        %v368 = vld [vmem:[%s1 + $0x24] sm:$0xf]
        %v369 = vld [vmem:[%s2] sm:$0xff]
        %v370 = vld [vmem:[%s2 + $0x8] sm:$0xff]
        %v371 = vld [vmem:[%s2 + $0x10] sm:$0xff]
        %v372 = vld [vmem:[%s2 + $0x18] sm:$0xff]
        %v373 = vld [vmem:[%s2 + $0x20] sm:$0xff]
        %v374 = vld [vmem:[%s2 + $0x28] sm:$0xff]
        %v375 = vld [vmem:[%s2 + $0x30] sm:$0xff]
        %v376 = vld [vmem:[%s2 + $0x38] sm:$0xff]
        %v377 = vld [vmem:[%s2 + $0x40] sm:$0xff]
        %v378 = vld [vmem:[%s2 + $0x48] sm:$0xff]
        %380 = vset.pattern.permute.xlu0 0
        %381 = vperm.xlu0 %380, %v369
        %v382 = vpop.permute.xlu0 %381
        %385 = vset.pattern.permute.xlu0 0
        %386 = vperm.xlu0 %385, %v370
        %v387 = vpop.permute.xlu0 %386
        %390 = vset.pattern.permute.xlu0 0
        %391 = vperm.xlu0 %390, %v371
        %v392 = vpop.permute.xlu0 %391
        %395 = vset.pattern.permute.xlu0 0
        %396 = vperm.xlu0 %395, %v372
        %v397 = vpop.permute.xlu0 %396
        %400 = vset.pattern.permute.xlu0 0
        %401 = vperm.xlu0 %400, %v373
        %v402 = vpop.permute.xlu0 %401
        %405 = vset.pattern.permute.xlu0 0
        %406 = vperm.xlu0 %405, %v374
        %v407 = vpop.permute.xlu0 %406
        %410 = vset.pattern.permute.xlu0 0
        %411 = vperm.xlu0 %410, %v375
        %v412 = vpop.permute.xlu0 %411
        %415 = vset.pattern.permute.xlu0 0
        %416 = vperm.xlu0 %415, %v376
        %v417 = vpop.permute.xlu0 %416
        %420 = vset.pattern.permute.xlu0 0
        %421 = vperm.xlu0 %420, %v377
        %v422 = vpop.permute.xlu0 %421
        %425 = vset.pattern.permute.xlu0 0
        %426 = vperm.xlu0 %425, %v378
        %v427 = vpop.permute.xlu0 %426
        %v439 = vunpack.c.l.b16 %v359
        %v440 = vunpack.c.l.b16 %v360
        %v441 = vunpack.c.l.b16 %v361
        %v442 = vunpack.c.l.b16 %v362
        %v443 = vunpack.c.l.b16 %v363
        %v444 = vunpack.c.l.b16 %v364
        %v445 = vunpack.c.l.b16 %v365
        %v446 = vunpack.c.l.b16 %v366
        %v447 = vunpack.c.l.b16 %v367
        %v448 = vunpack.c.l.b16 %v368
        %v449 = vpack.c.b16 %v440, %v439
        %v450 = vpack.c.b16 %v442, %v441
        %v451 = vpack.c.b16 %v444, %v443
        %v452 = vpack.c.b16 %v446, %v445
        %v453 = vpack.c.b16 %v448, %v447
        %vm454 = vcmask 64512
        %v456 = vsel %vm454, %v449, 0
        %v459 = vsel %vm454, %v450, 0
        %v462 = vsel %vm454, %v451, 0
        %v465 = vsel %vm454, %v452, 0
        %v468 = vsel %vm454, %v453, 0
        %vm470 = vcmask 1043456
        %v472 = vsel %vm470, %v358, 0
        %474 = vmatpush.bf16.msra.mxu0 0
        %475 = vmatpush.bf16.msra.mxu0 0
        %476 = vmatpush.bf16.msra.mxu0 0
        %477 = vmatpush.bf16.msra.mxu0 0
        %478 = vmatpush.bf16.msra.mxu0 0
        %479 = vmatpush.bf16.msra.mxu0 0
        %480 = vmatpush.bf16.msra.mxu0 0
        %481 = vmatpush.bf16.msra.mxu0 %v472
        %482 = vmatmul.bf16.gmra.mxu0 %v456
        %v483 = vpop.f32.mrf.mxu0
        %v484 = vadd.f32 %v382, %v483
        %v485 = vpop.f32.mrf.mxu0
        %v486 = vadd.f32 %v387, %v485
        %487 = vmatmul.bf16.gmra.mxu0 %v459
        %v488 = vpop.f32.mrf.mxu0
        %v489 = vadd.f32 %v392, %v488
        %v490 = vpop.f32.mrf.mxu0
        %v491 = vadd.f32 %v397, %v490
        %492 = vmatmul.bf16.gmra.mxu0 %v462
        %v493 = vpop.f32.mrf.mxu0
        %v494 = vadd.f32 %v402, %v493
        %v495 = vpop.f32.mrf.mxu0
        %v496 = vadd.f32 %v407, %v495
        %497 = vmatmul.bf16.gmra.mxu0 %v465
        %v498 = vpop.f32.mrf.mxu0
        %v499 = vadd.f32 %v412, %v498
        %v500 = vpop.f32.mrf.mxu0
        %v501 = vadd.f32 %v417, %v500
        %502 = vmatmul.bf16.gmra.mxu0 %v468
        %v503 = vpop.f32.mrf.mxu0
        %v504 = vadd.f32 %v422, %v503
        %v505 = vpop.f32.mrf.mxu0
        %v506 = vadd.f32 %v427, %v505
        %507 = vdwg.mxu0
        %v508 = vmul.f32 %v484, %v484
        %v509 = vmul.f32 %v486, %v486
        %v510 = vmul.f32 %v489, %v489
        %v511 = vmul.f32 %v491, %v491
        %v512 = vmul.f32 %v494, %v494
        %v513 = vmul.f32 %v496, %v496
        %v514 = vmul.f32 %v499, %v499
        %v515 = vmul.f32 %v501, %v501
        %v516 = vmul.f32 %v504, %v504
        %v517 = vmul.f32 %v506, %v506
        %v518 = vmul.f32 %v484, %v508
        %v519 = vmul.f32 %v486, %v509
        %v520 = vmul.f32 %v489, %v510
        %v521 = vmul.f32 %v491, %v511
        %v522 = vmul.f32 %v494, %v512
        %v523 = vmul.f32 %v496, %v513
        %v524 = vmul.f32 %v499, %v514
        %v525 = vmul.f32 %v501, %v515
        %v526 = vmul.f32 %v504, %v516
        %v527 = vmul.f32 %v506, %v517
        %v528 = vmul.f32 %v518, 0.044715
        %v529 = vmul.f32 %v519, 0.044715
        %v530 = vmul.f32 %v520, 0.044715
        %v531 = vmul.f32 %v521, 0.044715
        %v532 = vmul.f32 %v522, 0.044715
        %v533 = vmul.f32 %v523, 0.044715
        %v534 = vmul.f32 %v524, 0.044715
        %v535 = vmul.f32 %v525, 0.044715
        %v536 = vmul.f32 %v526, 0.044715
        %v537 = vmul.f32 %v527, 0.044715
        %v538 = vadd.f32 %v484, %v528
        %v539 = vadd.f32 %v486, %v529
        %v540 = vadd.f32 %v489, %v530
        %v541 = vadd.f32 %v491, %v531
        %v542 = vadd.f32 %v494, %v532
        %v543 = vadd.f32 %v496, %v533
        %v544 = vadd.f32 %v499, %v534
        %v545 = vadd.f32 %v501, %v535
        %v546 = vadd.f32 %v504, %v536
        %v547 = vadd.f32 %v506, %v537
        %v548 = vmul.f32 %v538, 0.7978846
        %v549 = vmul.f32 %v539, 0.7978846
        %v550 = vmul.f32 %v540, 0.7978846
        %v551 = vmul.f32 %v541, 0.7978846
        %v552 = vmul.f32 %v542, 0.7978846
        %v553 = vmul.f32 %v543, 0.7978846
        %v554 = vmul.f32 %v544, 0.7978846
        %v555 = vmul.f32 %v545, 0.7978846
        %v556 = vmul.f32 %v546, 0.7978846
        %v557 = vmul.f32 %v547, 0.7978846
        %v558 = vtanh.pop %v548
        %v559 = vtanh.pop %v549
        %v560 = vtanh.pop %v550
        %v561 = vtanh.pop %v551
        %v562 = vtanh.pop %v552
        %v563 = vtanh.pop %v553
        %v564 = vtanh.pop %v554
        %v565 = vtanh.pop %v555
        %v566 = vtanh.pop %v556
        %v567 = vtanh.pop %v557
        %v568 = vadd.f32 %v558, 1.0
        %v569 = vadd.f32 %v559, 1.0
        %v570 = vadd.f32 %v560, 1.0
        %v571 = vadd.f32 %v561, 1.0
        %v572 = vadd.f32 %v562, 1.0
        %v573 = vadd.f32 %v563, 1.0
        %v574 = vadd.f32 %v564, 1.0
        %v575 = vadd.f32 %v565, 1.0
        %v576 = vadd.f32 %v566, 1.0
        %v577 = vadd.f32 %v567, 1.0
        %v578 = vmul.f32 %v568, 0.5
        %v579 = vmul.f32 %v569, 0.5
        %v580 = vmul.f32 %v570, 0.5
        %v581 = vmul.f32 %v571, 0.5
        %v582 = vmul.f32 %v572, 0.5
        %v583 = vmul.f32 %v573, 0.5
        %v584 = vmul.f32 %v574, 0.5
        %v585 = vmul.f32 %v575, 0.5
        %v586 = vmul.f32 %v576, 0.5
        %v587 = vmul.f32 %v577, 0.5
        %v588 = vmul.f32 %v484, %v578
        %v589 = vmul.f32 %v486, %v579
        %v590 = vmul.f32 %v489, %v580
        %v591 = vmul.f32 %v491, %v581
        %v592 = vmul.f32 %v494, %v582
        %v593 = vmul.f32 %v496, %v583
        %v594 = vmul.f32 %v499, %v584
        %v595 = vmul.f32 %v501, %v585
        %v596 = vmul.f32 %v504, %v586
        %v597 = vmul.f32 %v506, %v587
        %v598 = vld [vmem:[%s3] sm:$0xff]
        %v599 = vld [vmem:[%s3 + $0x8] sm:$0xff]
        %v600 = vld [vmem:[%s3 + $0x10] sm:$0xff]
        %v601 = vld [vmem:[%s3 + $0x18] sm:$0xff]
        %v602 = vld [vmem:[%s3 + $0x20] sm:$0xff]
        %v603 = vld [vmem:[%s3 + $0x28] sm:$0xff]
        %v604 = vld [vmem:[%s3 + $0x30] sm:$0xff]
        %v605 = vld [vmem:[%s3 + $0x38] sm:$0xff]
        %v606 = vld [vmem:[%s3 + $0x40] sm:$0xff]
        %v607 = vld [vmem:[%s3 + $0x48] sm:$0xff]
        %v608 = vld [vmem:[%s4] sm:$0xff]
        %v609 = vld [vmem:[%s4 + $0x8] sm:$0xff]
        %v610 = vld [vmem:[%s4 + $0x10] sm:$0xff]
        %v611 = vld [vmem:[%s4 + $0x18] sm:$0xff]
        %v612 = vld [vmem:[%s4 + $0x20] sm:$0xff]
        %v613 = vld [vmem:[%s4 + $0x28] sm:$0xff]
        %v614 = vld [vmem:[%s4 + $0x30] sm:$0xff]
        %v615 = vld [vmem:[%s4 + $0x38] sm:$0xff]
        %v616 = vld [vmem:[%s4 + $0x40] sm:$0xff]
        %v617 = vld [vmem:[%s4 + $0x48] sm:$0xff]
        %v618 = vadd.f32 %v588, %v589
        %v619 = vadd.f32 %v618, %v590
        %v620 = vadd.f32 %v619, %v591
        %v621 = vadd.f32 %v620, %v592
        %v622 = vadd.f32 %v621, %v593
        %v623 = vadd.f32 %v622, %v594
        %v624 = vadd.f32 %v623, %v595
        %v625 = vadd.f32 %v624, %v596
        %v626 = vadd.f32 %v625, %v597
        %v627 = vrot.slane %v626, 4
        %v628 = vadd.f32 %v626, %v627
        %v629 = vrot.slane %v628, 2
        %v630 = vadd.f32 %v628, %v629
        %v631 = vrot.slane %v630, 1
        %v632 = vadd.f32 %v630, %v631
        %v633 = vrcp.pop 80.0
        %v634 = vmul.f32 80.0, %v633
        %v635 = vsub.f32 1.0, %v634
        %v636 = vmul.f32 %v633, %v635
        %v637 = vadd.f32 %v633, %v636
        %vm638 = vweird.f32 %v633
        %v639 = vsel %vm638, %v633, %v637
        %v640 = vmul.f32 %v632, %v639
        %v641 = vsub.f32 %v588, %v640
        %v642 = vsub.f32 %v589, %v640
        %v643 = vsub.f32 %v590, %v640
        %v644 = vsub.f32 %v591, %v640
        %v645 = vsub.f32 %v592, %v640
        %v646 = vsub.f32 %v593, %v640
        %v647 = vsub.f32 %v594, %v640
        %v648 = vsub.f32 %v595, %v640
        %v649 = vsub.f32 %v596, %v640
        %v650 = vsub.f32 %v597, %v640
        %v651 = vmul.f32 %v641, %v641
        %v652 = vmul.f32 %v642, %v642
        %v653 = vmul.f32 %v643, %v643
        %v654 = vmul.f32 %v644, %v644
        %v655 = vmul.f32 %v645, %v645
        %v656 = vmul.f32 %v646, %v646
        %v657 = vmul.f32 %v647, %v647
        %v658 = vmul.f32 %v648, %v648
        %v659 = vmul.f32 %v649, %v649
        %v660 = vmul.f32 %v650, %v650
        %v661 = vadd.f32 %v651, %v652
        %v662 = vadd.f32 %v661, %v653
        %v663 = vadd.f32 %v662, %v654
        %v664 = vadd.f32 %v663, %v655
        %v665 = vadd.f32 %v664, %v656
        %v666 = vadd.f32 %v665, %v657
        %v667 = vadd.f32 %v666, %v658
        %v668 = vadd.f32 %v667, %v659
        %v669 = vadd.f32 %v668, %v660
        %v670 = vrot.slane %v669, 4
        %v671 = vadd.f32 %v669, %v670
        %v672 = vrot.slane %v671, 2
        %v673 = vadd.f32 %v671, %v672
        %v674 = vrot.slane %v673, 1
        %v675 = vadd.f32 %v673, %v674
        %v676 = vmul.f32 %v675, %v639
        %v677 = vadd.f32 %v676, 1e-05
        %v678 = vrsqrt.pop %v677
        %v679 = vmul.f32 %v678, %v677
        %v680 = vmul.f32 %v679, %v678
        %v681 = vmul.f32 0.5, %v680
        %v682 = vsub.f32 1.5, %v681
        %v683 = vmul.f32 %v678, %v682
        %vm684 = vweird.f32 %v677
        %vm685 = vweird.f32 %v678
        %vm686 = vmor %vm684, %vm685
        %v687 = vsel %vm686, %v678, %v683
        %v688 = vmul.f32 %v641, %v687
        %v689 = vmul.f32 %v642, %v687
        %v690 = vmul.f32 %v643, %v687
        %v691 = vmul.f32 %v644, %v687
        %v692 = vmul.f32 %v645, %v687
        %v693 = vmul.f32 %v646, %v687
        %v694 = vmul.f32 %v647, %v687
        %v695 = vmul.f32 %v648, %v687
        %v696 = vmul.f32 %v649, %v687
        %v697 = vmul.f32 %v650, %v687
        %699 = vset.pattern.permute.xlu0 0
        %700 = vperm.xlu0 %699, %v598
        %v701 = vpop.permute.xlu0 %700
        %704 = vset.pattern.permute.xlu0 0
        %705 = vperm.xlu0 %704, %v599
        %v706 = vpop.permute.xlu0 %705
        %709 = vset.pattern.permute.xlu0 0
        %710 = vperm.xlu0 %709, %v600
        %v711 = vpop.permute.xlu0 %710
        %714 = vset.pattern.permute.xlu0 0
        %715 = vperm.xlu0 %714, %v601
        %v716 = vpop.permute.xlu0 %715
        %719 = vset.pattern.permute.xlu0 0
        %720 = vperm.xlu0 %719, %v602
        %v721 = vpop.permute.xlu0 %720
        %724 = vset.pattern.permute.xlu0 0
        %725 = vperm.xlu0 %724, %v603
        %v726 = vpop.permute.xlu0 %725
        %729 = vset.pattern.permute.xlu0 0
        %730 = vperm.xlu0 %729, %v604
        %v731 = vpop.permute.xlu0 %730
        %734 = vset.pattern.permute.xlu0 0
        %735 = vperm.xlu0 %734, %v605
        %v736 = vpop.permute.xlu0 %735
        %739 = vset.pattern.permute.xlu0 0
        %740 = vperm.xlu0 %739, %v606
        %v741 = vpop.permute.xlu0 %740
        %744 = vset.pattern.permute.xlu0 0
        %745 = vperm.xlu0 %744, %v607
        %v746 = vpop.permute.xlu0 %745
        %v748 = vmul.f32 %v688, %v701
        %v749 = vmul.f32 %v689, %v706
        %v750 = vmul.f32 %v690, %v711
        %v751 = vmul.f32 %v691, %v716
        %v752 = vmul.f32 %v692, %v721
        %v753 = vmul.f32 %v693, %v726
        %v754 = vmul.f32 %v694, %v731
        %v755 = vmul.f32 %v695, %v736
        %v756 = vmul.f32 %v696, %v741
        %v757 = vmul.f32 %v697, %v746
        %759 = vset.pattern.permute.xlu0 0
        %760 = vperm.xlu0 %759, %v608
        %v761 = vpop.permute.xlu0 %760
        %764 = vset.pattern.permute.xlu0 0
        %765 = vperm.xlu0 %764, %v609
        %v766 = vpop.permute.xlu0 %765
        %769 = vset.pattern.permute.xlu0 0
        %770 = vperm.xlu0 %769, %v610
        %v771 = vpop.permute.xlu0 %770
        %774 = vset.pattern.permute.xlu0 0
        %775 = vperm.xlu0 %774, %v611
        %v776 = vpop.permute.xlu0 %775
        %779 = vset.pattern.permute.xlu0 0
        %780 = vperm.xlu0 %779, %v612
        %v781 = vpop.permute.xlu0 %780
        %784 = vset.pattern.permute.xlu0 0
        %785 = vperm.xlu0 %784, %v613
        %v786 = vpop.permute.xlu0 %785
        %789 = vset.pattern.permute.xlu0 0
        %790 = vperm.xlu0 %789, %v614
        %v791 = vpop.permute.xlu0 %790
        %794 = vset.pattern.permute.xlu0 0
        %795 = vperm.xlu0 %794, %v615
        %v796 = vpop.permute.xlu0 %795
        %799 = vset.pattern.permute.xlu0 0
        %800 = vperm.xlu0 %799, %v616
        %v801 = vpop.permute.xlu0 %800
        %804 = vset.pattern.permute.xlu0 0
        %805 = vperm.xlu0 %804, %v617
        %v806 = vpop.permute.xlu0 %805
        %v808 = vadd.f32 %v748, %v761
        %v809 = vadd.f32 %v749, %v766
        %v810 = vadd.f32 %v750, %v771
        %v811 = vadd.f32 %v751, %v776
        %v812 = vadd.f32 %v752, %v781
        %v813 = vadd.f32 %v753, %v786
        %v814 = vadd.f32 %v754, %v791
        %v815 = vadd.f32 %v755, %v796
        %v816 = vadd.f32 %v756, %v801
        %v817 = vadd.f32 %v757, %v806
        %v818 = vld [vmem:[%s5] sm:$0xf]
        %v819 = vpack.c.bf16 %v809, %v808
        %v820 = vpack.c.bf16 %v811, %v810
        %v821 = vpack.c.bf16 %v813, %v812
        %v822 = vpack.c.bf16 %v815, %v814
        %v823 = vpack.c.bf16 %v817, %v816
        %v824 = vld [vmem:[%s6] sm:$0xff]
        %826 = vset.pattern.permute.xlu0 0
        %827 = vperm.xlu0 %826, %v824
        %v828 = vpop.permute.xlu0 %827
        %vm830 = vcmask 654336
        %v832 = vsel %vm830, %v818, 0
        %834 = vmatpush.bf16.msra.mxu0 0
        %835 = vmatpush.bf16.msra.mxu0 0
        %836 = vmatpush.bf16.msra.mxu0 0
        %837 = vmatpush.bf16.msra.mxu0 %v823
        %838 = vmatpush.bf16.msra.mxu0 %v822
        %839 = vmatpush.bf16.msra.mxu0 %v821
        %840 = vmatpush.bf16.msra.mxu0 %v820
        %841 = vmatpush.bf16.msra.mxu0 %v819
        %842 = vmatmul.bf16.gmra.mxu0 %v832
        %v843 = vpop.f32.mrf.mxu0
        %v844 = vadd.f32 %v828, %v843
        %v845 = vpop.f32.mrf.mxu0
        %846 = vdwg.mxu0
        %v847 = vmul.f32 %v844, %v844
        %v848 = vmul.f32 %v844, %v847
        %v849 = vmul.f32 %v848, 0.044715
        %v850 = vadd.f32 %v844, %v849
        %v851 = vmul.f32 %v850, 0.7978846
        %v852 = vtanh.pop %v851
        %v853 = vadd.f32 %v852, 1.0
        %v854 = vmul.f32 %v853, 0.5
        %v855 = vmul.f32 %v844, %v854
        %v856 = vld [vmem:[%s7] sm:$0xff]
        %v857 = vld [vmem:[%s8] sm:$0xff]
        %v858 = vrot.slane %v855, 4
        %v859 = vadd.f32 %v855, %v858
        %v860 = vrot.slane %v859, 2
        %v861 = vadd.f32 %v859, %v860
        %v862 = vrot.slane %v861, 1
        %v863 = vadd.f32 %v861, %v862
        %v864 = vrcp.pop 8.0
        %v865 = vmul.f32 8.0, %v864
        %v866 = vsub.f32 1.0, %v865
        %v867 = vmul.f32 %v864, %v866
        %v868 = vadd.f32 %v864, %v867
        %vm869 = vweird.f32 %v864
        %v870 = vsel %vm869, %v864, %v868
        %v871 = vmul.f32 %v863, %v870
        %v872 = vsub.f32 %v855, %v871
        %v873 = vmul.f32 %v872, %v872
        %v874 = vrot.slane %v873, 4
        %v875 = vadd.f32 %v873, %v874
        %v876 = vrot.slane %v875, 2
        %v877 = vadd.f32 %v875, %v876
        %v878 = vrot.slane %v877, 1
        %v879 = vadd.f32 %v877, %v878
        %v880 = vmul.f32 %v879, %v870
        %v881 = vadd.f32 %v880, 1e-05
        %v882 = vrsqrt.pop %v881
        %v883 = vmul.f32 %v882, %v881
        %v884 = vmul.f32 %v883, %v882
        %v885 = vmul.f32 0.5, %v884
        %v886 = vsub.f32 1.5, %v885
        %v887 = vmul.f32 %v882, %v886
        %vm888 = vweird.f32 %v881
        %vm889 = vweird.f32 %v882
        %vm890 = vmor %vm888, %vm889
        %v891 = vsel %vm890, %v882, %v887
        %v892 = vmul.f32 %v872, %v891
        %894 = vset.pattern.permute.xlu0 0
        %895 = vperm.xlu0 %894, %v856
        %v896 = vpop.permute.xlu0 %895
        %v898 = vmul.f32 %v892, %v896
        %900 = vset.pattern.permute.xlu0 0
        %901 = vperm.xlu0 %900, %v857
        %v902 = vpop.permute.xlu0 %901
        %v904 = vadd.f32 %v898, %v902
        %v905 = vadd.f32 %v904, %v357
        %906 = vst [vmem:[%s347] sm:$0xff] %v905
        %s907 = sand.u32 %s241, 1
        %s908 = scalar_lea.sflag [#allocation3], %s907
        %s909 = sand.u32 %s241, 1
        %s910 = smul.addr %s909, 8
        %s911 = scalar_lea.vmem [#allocation2], %s910
        // Predicated region
        $region57: #{tpu_custom_call.1} parent=55 // pred_check
          %p912 = pneg %p251
        $region58: #{tpu_custom_call.1} parent=55 // pred_check_branch
          %914 = sbr.rel (%p912) target = $region60
        $region59: #{tpu_custom_call.1} parent=55 // pred_region
          %916 = vsyncadd %s908, 0
          %s917 = smul.addr %s27, 2
          %s918 = sadd.s32 %s28, %s917
          %s919 = smul.addr %s918, 8
          %s920 = scalar_lea.hbm %s9, %s919
          %s922 = sshll.u32 %s911, 4
          %s923 = int_to_ptr.vmem [resolvable:$true] %s922
          %s924 = sshll.u32 %s920, 4
          %s925 = int_to_ptr.hbm [resolvable:$true] %s924
          %927 = dma.vmem_to_hbm [thread:$0]  %s923, 128, %s925, %s908
        $region60: #{tpu_custom_call.1} parent=55 // pred_fallthru
          _
      $region56: #{tpu_custom_call.1} parent=5 // pred_fallthru
        _
      %p928 = scmp.le.s32.totalorder 2, %s18
      // Predicated region
      $region61: #{tpu_custom_call.1} parent=5 // pred_check
        %p929 = pneg %p928
      $region62: #{tpu_custom_call.1} parent=5 // pred_check_branch
        %931 = sbr.rel (%p929) target = $region64
      $region63: #{tpu_custom_call.1} parent=5 // pred_region
        %s932 = ssub.s32 %s18, 2
        // Predicated region
        $region65: #{tpu_custom_call.1} parent=63 // pred_check
          %p933 = pneg %p257
        $region66: #{tpu_custom_call.1} parent=63 // pred_check_branch
          %935 = sbr.rel (%p933) target = $region68
        $region67: #{tpu_custom_call.1} parent=63 // pred_region
          %s936 = sand.u32 %s242, 1
          %s937 = scalar_lea.sflag [#allocation3], %s936
          %s938 = sand.u32 %s242, 1
          %s939 = smul.addr %s938, 8
          %s940 = scalar_lea.vmem [#allocation2], %s939
          %942 = dma.done %s937, 128
        $region68: #{tpu_custom_call.1} parent=63 // pred_fallthru
          _
      $region64: #{tpu_custom_call.1} parent=5 // pred_fallthru
        _
    $region6: #{tpu_custom_call.1} parent=1 // loop_footer
      %s22 = sadd.s32 1, %s18
    $region7: #{tpu_custom_call.1} parent=1 // loop_footer_branch
      %17 = sbr.rel target = $region3
    $region8: #{tpu_custom_call.1} parent=1 // loop_exit
      _
    %943 = vsyncpa [#allocation3], 1
    %s944 = scalar_lea.sflag [#allocation3], 1
    %945 = vsyncpa %s944, 1

</llo_original>
